<compile_context>
chip_gen: v7x
topology: tpu7x:2x2x1
jax: 0.10.0
libtpu: 0.0.40
codegen_flags: <defaults>
</compile_context>

<pallas_src>
import jax
import jax.numpy as jnp
from jax.experimental import pallas as pl
from jax.experimental.pallas import tpu as pltpu

IN_DIM = 96
HID1 = 256
HID2 = 128
OUT_DIM = 50
OUT_PAD = 128  # lane-dense padded output width (multiple of 128 lanes)


def _round_up(x, m):
    return ((x + m - 1) // m) * m


def classifier_head_kernel(x_ref, w1_ref, b1_ref, w2_ref, b2_ref, w3_ref, b3_ref, o_ref):
    """Fused MLP head on one batch tile: fc1 -> relu -> fc2 -> relu -> fc3 (padded to 128 cols)."""
    x = x_ref[...]                                                       # (TB, 96)

    h1 = jnp.dot(x, w1_ref[...], preferred_element_type=jnp.float32) + b1_ref[...]
    h1 = jnp.maximum(h1, 0.0)                                            # ReLU  (TB, 256)
    h1 = h1.astype(w2_ref.dtype)

    h2 = jnp.dot(h1, w2_ref[...], preferred_element_type=jnp.float32) + b2_ref[...]
    h2 = jnp.maximum(h2, 0.0)                                            # ReLU  (TB, 128)
    h2 = h2.astype(w3_ref.dtype)

    out = jnp.dot(h2, w3_ref[...], preferred_element_type=jnp.float32) + b3_ref[...]
    o_ref[...] = out.astype(o_ref.dtype)                                 # (TB, 128) unmasked vst


def classifier_forward(x, params, *, tile_b=256, use_bf16=False):
    """x: (B, IN_DIM) float32 features (output of base_model). Returns (B, OUT_DIM) float32."""
    w1, b1, w2, b2, w3, b3 = params
    B, F = x.shape
    assert F == IN_DIM

    # --- Pad the final layer to 128 output lanes (unmasked full-lane stores). ---
    w3p = jnp.zeros((HID2, OUT_PAD), w3.dtype).at[:, :OUT_DIM].set(w3)
    b3p = jnp.zeros((1, OUT_PAD), b3.dtype).at[:, :OUT_DIM].set(b3)

    if use_bf16:
        # Optional: bf16 matmul inputs (f32 accumulation kept via preferred_element_type).
        x = x.astype(jnp.bfloat16)
        w1 = w1.astype(jnp.bfloat16)
        w2 = w2.astype(jnp.bfloat16)
        w3p = w3p.astype(jnp.bfloat16)

    # --- Batch tile: as large as requested, but keep >=2 grid steps when the batch
    #     allows (megacore sharding), then pad B up to a multiple of the tile. ---
    tb = max(8, min(tile_b, _round_up(pl.cdiv(B, 2), 8)))
    B_pad = _round_up(B, tb)
    if B_pad != B:
        x = jnp.pad(x, ((0, B_pad - B), (0, 0)))

    grid = (B_pad // tb,)
    resident = lambda i: (0, 0)  # weights / biases: same full block every grid step

    out = pl.pallas_call(
        classifier_head_kernel,
        out_shape=jax.ShapeDtypeStruct((B_pad, OUT_PAD), jnp.float32),
        grid_spec=pl.GridSpec(
            grid=grid,
            in_specs=[
                pl.BlockSpec((tb, IN_DIM), lambda i: (i, 0)),   # x tile (K=96 = full dim)
                pl.BlockSpec((IN_DIM, HID1), resident),         # W1
                pl.BlockSpec((1, HID1), resident),              # b1
                pl.BlockSpec((HID1, HID2), resident),           # W2
                pl.BlockSpec((1, HID2), resident),              # b2
                pl.BlockSpec((HID2, OUT_PAD), resident),        # W3 (padded to 128 cols)
                pl.BlockSpec((1, OUT_PAD), resident),           # b3 (padded to 128 cols)
            ],
            out_specs=pl.BlockSpec((tb, OUT_PAD), lambda i: (i, 0)),
        ),
        compiler_params=pltpu.CompilerParams(
            dimension_semantics=("parallel",),
        ),
    )(x, w1, b1, w2, b2, w3p, b3p)

    # Strip batch padding and the lane padding back to the true 50 outputs.
    return out[:B, :OUT_DIM]


def init_params(key):
    """Deterministic init matching nn.Linear shapes (stored transposed: (in, out))."""
    ks = jax.random.split(key, 6)

    def linear(kw, kb, fan_in, fan_out):
        bound = 1.0 / jnp.sqrt(fan_in)
        w = jax.random.uniform(kw, (fan_in, fan_out), jnp.float32, -bound, bound)
        b = jax.random.uniform(kb, (1, fan_out), jnp.float32, -bound, bound)
        return w, b

    w1, b1 = linear(ks[0], ks[1], IN_DIM, HID1)
    w2, b2 = linear(ks[2], ks[3], HID1, HID2)
    w3, b3 = linear(ks[4], ks[5], HID2, OUT_DIM)
    return (w1, b1, w2, b2, w3, b3)


def reference_forward(x, params):
    """Pure-JAX reference matching PyTorch semantics."""
    w1, b1, w2, b2, w3, b3 = params
    h = jnp.maximum(x @ w1 + b1, 0.0)
    h = jnp.maximum(h @ w2 + b2, 0.0)
    return h @ w3 + b3


if __name__ == "__main__":
    key = jax.random.PRNGKey(0)
    k_params, k_x = jax.random.split(key)

    params = init_params(k_params)

    # Small demo batch with an odd size to exercise the batch-padding path; the tile
    # shrinks automatically so the grid still has 2 parallel steps.
    B = 20
    x = jax.random.normal(k_x, (B, IN_DIM), jnp.float32)

    out = classifier_forward(x, params, tile_b=256)
    out = jax.block_until_ready(out)

    ref = reference_forward(x, params)
    assert out.shape == (B, OUT_DIM)
    assert jnp.allclose(out, ref, atol=1e-4, rtol=1e-4)

    print("KERNEL_OK")
</pallas_src>

<mosaic_0001>
module attributes {stable_mosaic.version = 11 : i64} {
  func.func @classifier_head_kernel(%arg0: i32, %arg1: memref<16x96xf32, #tpu.memory_space<vmem>>, %arg2: memref<96x256xf32, #tpu.memory_space<vmem>>, %arg3: memref<1x256xf32, #tpu.memory_space<vmem>>, %arg4: memref<256x128xf32, #tpu.memory_space<vmem>>, %arg5: memref<1x128xf32, #tpu.memory_space<vmem>>, %arg6: memref<128x128xf32, #tpu.memory_space<vmem>>, %arg7: memref<1x128xf32, #tpu.memory_space<vmem>>, %arg8: memref<16x128xf32, #tpu.memory_space<vmem>>) attributes {dimension_semantics = [#tpu.dimension_semantics<parallel>], iteration_bounds = array<i64: 2>, scalar_prefetch = 0 : i64, scratch_operands = 0 : i64, tpu.core_type = #tpu.core_type<tc>, window_params = [{transform_indices = @transform_0, window_bounds = array<i64: 16, 96>}, {pipeline_mode = #tpu.pipeline_mode<synchronous>, transform_indices = @transform_1, window_bounds = array<i64: 96, 256>}, {pipeline_mode = #tpu.pipeline_mode<synchronous>, transform_indices = @transform_2, window_bounds = array<i64: 1, 256>}, {pipeline_mode = #tpu.pipeline_mode<synchronous>, transform_indices = @transform_3, window_bounds = array<i64: 256, 128>}, {pipeline_mode = #tpu.pipeline_mode<synchronous>, transform_indices = @transform_4, window_bounds = array<i64: 1, 128>}, {pipeline_mode = #tpu.pipeline_mode<synchronous>, transform_indices = @transform_5, window_bounds = array<i64: 128, 128>}, {pipeline_mode = #tpu.pipeline_mode<synchronous>, transform_indices = @transform_6, window_bounds = array<i64: 1, 128>}, {transform_indices = @transform_7, window_bounds = array<i64: 16, 128>}]} {
    %c0 = arith.constant 0 : index
    %c0_0 = arith.constant 0 : index
    %0 = vector.load %arg1[%c0, %c0_0] : memref<16x96xf32, #tpu.memory_space<vmem>>, vector<16x96xf32>
    %c0_1 = arith.constant 0 : index
    %c0_2 = arith.constant 0 : index
    %1 = vector.load %arg2[%c0_1, %c0_2] : memref<96x256xf32, #tpu.memory_space<vmem>>, vector<96x256xf32>
    %cst = arith.constant dense<0.000000e+00> : vector<16x256xf32>
    %2 = tpu.matmul %0, %1, %cst {dimension_numbers = #tpu.dot_dimension_numbers<[1], [0], [0], [1], [0, 0, 1, 1], [], []>} : vector<16x96xf32>, vector<96x256xf32>, vector<16x256xf32> -> vector<16x256xf32>
    %c0_3 = arith.constant 0 : index
    %c0_4 = arith.constant 0 : index
    %3 = vector.load %arg3[%c0_3, %c0_4] : memref<1x256xf32, #tpu.memory_space<vmem>>, vector<1x256xf32>
    %4 = vector.broadcast %3 : vector<1x256xf32> to vector<16x256xf32>
    %5 = arith.addf %2, %4 : vector<16x256xf32>
    %cst_5 = arith.constant 0.000000e+00 : f32
    %6 = vector.broadcast %cst_5 : f32 to vector<16x256xf32>
    %7 = arith.maximumf %5, %6 : vector<16x256xf32>
    %c0_6 = arith.constant 0 : index
    %c0_7 = arith.constant 0 : index
    %8 = vector.load %arg4[%c0_6, %c0_7] : memref<256x128xf32, #tpu.memory_space<vmem>>, vector<256x128xf32>
    %cst_8 = arith.constant dense<0.000000e+00> : vector<16x128xf32>
    %9 = tpu.matmul %7, %8, %cst_8 {dimension_numbers = #tpu.dot_dimension_numbers<[1], [0], [0], [1], [0, 0, 1, 1], [], []>} : vector<16x256xf32>, vector<256x128xf32>, vector<16x128xf32> -> vector<16x128xf32>
    %c0_9 = arith.constant 0 : index
    %c0_10 = arith.constant 0 : index
    %10 = vector.load %arg5[%c0_9, %c0_10] : memref<1x128xf32, #tpu.memory_space<vmem>>, vector<1x128xf32>
    %11 = vector.broadcast %10 : vector<1x128xf32> to vector<16x128xf32>
    %12 = arith.addf %9, %11 : vector<16x128xf32>
    %cst_11 = arith.constant 0.000000e+00 : f32
    %13 = vector.broadcast %cst_11 : f32 to vector<16x128xf32>
    %14 = arith.maximumf %12, %13 : vector<16x128xf32>
    %c0_12 = arith.constant 0 : index
    %c0_13 = arith.constant 0 : index
    %15 = vector.load %arg6[%c0_12, %c0_13] : memref<128x128xf32, #tpu.memory_space<vmem>>, vector<128x128xf32>
    %cst_14 = arith.constant dense<0.000000e+00> : vector<16x128xf32>
    %16 = tpu.matmul %14, %15, %cst_14 {dimension_numbers = #tpu.dot_dimension_numbers<[1], [0], [0], [1], [0, 0, 1, 1], [], []>} : vector<16x128xf32>, vector<128x128xf32>, vector<16x128xf32> -> vector<16x128xf32>
    %c0_15 = arith.constant 0 : index
    %c0_16 = arith.constant 0 : index
    %17 = vector.load %arg7[%c0_15, %c0_16] : memref<1x128xf32, #tpu.memory_space<vmem>>, vector<1x128xf32>
    %18 = vector.broadcast %17 : vector<1x128xf32> to vector<16x128xf32>
    %19 = arith.addf %16, %18 : vector<16x128xf32>
    %c0_17 = arith.constant 0 : index
    %c0_18 = arith.constant 0 : index
    %20 = vector.load %arg8[%c0_17, %c0_18] : memref<16x128xf32, #tpu.memory_space<vmem>>, vector<16x128xf32>
    tpu.vector_store %arg8[%c0_17, %c0_18], %19 {strides = array<i32>} : memref<16x128xf32, #tpu.memory_space<vmem>>, vector<16x128xf32>,
    return
  }
  func.func @transform_0(%arg0: i32) -> (i32, i32) {
    %c0_i32 = arith.constant 0 : i32
    %c0_i32_0 = arith.constant 0 : i32
    return %arg0, %c0_i32 : i32, i32
  }
  func.func @transform_1(%arg0: i32) -> (i32, i32) {
    %c0_i32 = arith.constant 0 : i32
    %c0_i32_0 = arith.constant 0 : i32
    %c0_i32_1 = arith.constant 0 : i32
    return %c0_i32, %c0_i32_0 : i32, i32
  }
  func.func @transform_2(%arg0: i32) -> (i32, i32) {
    %c0_i32 = arith.constant 0 : i32
    %c0_i32_0 = arith.constant 0 : i32
    %c0_i32_1 = arith.constant 0 : i32
    return %c0_i32, %c0_i32_0 : i32, i32
  }
  func.func @transform_3(%arg0: i32) -> (i32, i32) {
    %c0_i32 = arith.constant 0 : i32
    %c0_i32_0 = arith.constant 0 : i32
    %c0_i32_1 = arith.constant 0 : i32
    return %c0_i32, %c0_i32_0 : i32, i32
  }
  func.func @transform_4(%arg0: i32) -> (i32, i32) {
    %c0_i32 = arith.constant 0 : i32
    %c0_i32_0 = arith.constant 0 : i32
    %c0_i32_1 = arith.constant 0 : i32
    return %c0_i32, %c0_i32_0 : i32, i32
  }
  func.func @transform_5(%arg0: i32) -> (i32, i32) {
    %c0_i32 = arith.constant 0 : i32
    %c0_i32_0 = arith.constant 0 : i32
    %c0_i32_1 = arith.constant 0 : i32
    return %c0_i32, %c0_i32_0 : i32, i32
  }
  func.func @transform_6(%arg0: i32) -> (i32, i32) {
    %c0_i32 = arith.constant 0 : i32
    %c0_i32_0 = arith.constant 0 : i32
    %c0_i32_1 = arith.constant 0 : i32
    return %c0_i32, %c0_i32_0 : i32, i32
  }
  func.func @transform_7(%arg0: i32) -> (i32, i32) {
    %c0_i32 = arith.constant 0 : i32
    %c0_i32_0 = arith.constant 0 : i32
    return %arg0, %c0_i32 : i32, i32
  }
}

</mosaic_0001>

<llo_original>
// kernel: tpu_custom_call.1
$region0: #{tpu_custom_call.1}
  #allocation0 [shape = 'u32[]', space=smem, size = 0x4, offset = 0x4, fixed_abs, tag = 'smem constant byte address 0x4 - core index']
  #allocation1 [shape = 'u32[144,128]{1,0:T(1,128)}', space=vmem, size = 0x12000, scoped, tag = 'internal scratch']
  %s0 = inlined_call_operand.hbm [shape: f32[32,96], index: 0, kind: input, shape index: {}]
  %s1 = inlined_call_operand.hbm [shape: f32[96,256], index: 1, kind: input, shape index: {}]
  %s2 = inlined_call_operand.vmem [shape: f32[1,256], index: 2, kind: input, shape index: {}]
  %s3 = inlined_call_operand.hbm [shape: f32[256,128], index: 3, kind: input, shape index: {}]
  %s4 = inlined_call_operand.vmem [shape: f32[1,128], index: 4, kind: input, shape index: {}]
  %s5 = inlined_call_operand.hbm [shape: f32[128,128], index: 5, kind: input, shape index: {}]
  %s6 = inlined_call_operand.vmem [shape: f32[1,128], index: 6, kind: input, shape index: {}]
  %s7 = inlined_call_operand.hbm [shape: f32[32,128], index: 7, kind: output, shape index: {}]
  %s8 = sld [smem:[#allocation0]]
  $region77: #{tpu_custom_call.1} parent=0
    _
  %s10 = ssub.s32 1, %s8
  %s11 = scalar_select 0, %s10, %s8
  $region1: #{tpu_custom_call.1} parent=0
    #allocation2 [shape = 'u8[16384]{0}', space=vmem, size = 0x4000, scoped, tag = 'input window, operand 0']
    #allocation3 [shape = 's32[2]{0}', space=sflag, size = 0x8, scoped, tag = 'scoped memory for tpu_custom_call.1']
    #allocation4 [shape = 's32[2]{0}', space=sflag, size = 0x8, scoped, tag = 'scoped memory for tpu_custom_call.1']
    #allocation5 [shape = 'u8[98304]{0}', space=vmem, size = 0x18000, scoped, tag = 'input window, operand 1, single buffered']
    #allocation6 [shape = 's32[1]{0}', space=sflag, size = 0x4, scoped, tag = 'scoped memory for tpu_custom_call.1']
    #allocation7 [shape = 'u8[131072]{0}', space=vmem, size = 0x20000, scoped, tag = 'input window, operand 3, single buffered']
    #allocation8 [shape = 'u8[65536]{0}', space=vmem, size = 0x10000, scoped, tag = 'input window, operand 5, single buffered']
    #allocation9 [shape = 's32[1]{0}', space=sflag, size = 0x4, scoped, tag = 'scoped memory for tpu_custom_call.1']
    #allocation10 [shape = 'u8[16384]{0}', space=vmem, size = 0x4000, scoped, tag = 'output window, operand 0']
    %12 = vsyncpa [#allocation3], 0
    %s13 = scalar_lea.sflag [#allocation3], 1
    %14 = vsyncpa %s13, 0
    %15 = vsyncpa [#allocation6], 0
    %16 = vsyncpa [#allocation9], 0
    %17 = vsyncpa [#allocation4], 0
    %s18 = scalar_lea.sflag [#allocation4], 1
    %19 = vsyncpa %s18, 0
    loop: start=0, step=1, limit=4
    $region2: #{tpu_custom_call.1} parent=1 // loop_pre_header
      _
    $region3: #{tpu_custom_call.1} parent=1 // loop_header
      %s21 = sphi 0, %s25
      %p22 = scmp.ge.s32.totalorder %s21, 4
      %s31 = sphi 0, %s33
      %s34 = sphi 0, %s31
      %s35 = sphi 0, %s34
      %s51 = sphi 0, %s35
      %s55 = sphi 0, %s55
      %s57 = sphi 0, %s55
      %s58 = sphi 0, %s57
      %s72 = sphi 0, %s58
      %s76 = sphi 0, %s76
      %s78 = sphi 0, %s76
      %s79 = sphi 0, %s78
      %s93 = sphi 0, %s79
      %s97 = sphi 0, %s97
      %s99 = sphi 0, %s97
      %s100 = sphi 0, %s99
      %s114 = sphi 0, %s100
      %s118 = sphi 0, %s118
      %s120 = sphi 0, %s118
      %s121 = sphi 0, %s120
      %s135 = sphi 0, %s121
      %s139 = sphi 0, %s139
      %s141 = sphi 0, %s139
      %s142 = sphi 0, %s141
      %s156 = sphi 0, %s142
      %s160 = sphi 0, %s160
      %s162 = sphi 0, %s160
      %s163 = sphi 0, %s162
      %s177 = sphi 0, %s163
      %s183 = sphi 0, %s185
      %s186 = sphi 0, %s183
      %s187 = sphi 0, %s186
      %s203 = sphi 0, %s187
    $region4: #{tpu_custom_call.1} parent=1 // loop_header_branch
      %24 = sbr.rel (%p22) target = $region8
    $region5: #{tpu_custom_call.1} parent=1 // loop_body
      %s26 = ssub.s32 %s21, 1
      %s27 = ssub.s32 %s21, 2
      %s28 = sadd.s32 %s21, 1
      %s29 = ssub.s32 %s21, %s28
      %p30 = scmp.eq.s32.totalorder %s29, 0
      %s32 = sadd.s32 %s31, 1
      %s33 = scalar_select %p30, %s31, %s32
      %p36 = pneg %p30
      %p37 = scmp.eq.s32.totalorder %s21, 1
      %p38 = por %p36, %p37
      %p39 = scmp.ne.s32.totalorder %s31, %s34
      %p40 = scmp.eq.s32.totalorder %s21, 0
      %p41 = por %p39, %p40
      %p42 = scmp.ne.s32.totalorder %s31, %s34
      %p43 = scmp.eq.s32.totalorder %s26, 1
      %p44 = por %p42, %p43
      %p45 = scmp.ne.s32.totalorder %s34, %s35
      %p46 = scmp.eq.s32.totalorder %s26, 0
      %p47 = por %p45, %p46
      %p48 = scmp.ne.s32.totalorder %s34, %s35
      %p49 = scmp.eq.s32.totalorder %s27, 1
      %p50 = por %p48, %p49
      %p52 = scmp.ne.s32.totalorder %s35, %s51
      %p53 = scmp.eq.s32.totalorder %s27, 0
      %p54 = por %p52, %p53
      %s56 = sadd.s32 %s55, 1
      %p59 = scmp.eq.s32.totalorder %s21, 1
      %p60 = scmp.ne.s32.totalorder %s55, %s57
      %p61 = scmp.eq.s32.totalorder %s21, 0
      %p62 = por %p60, %p61
      %p63 = scmp.ne.s32.totalorder %s55, %s57
      %p64 = scmp.eq.s32.totalorder %s26, 1
      %p65 = por %p63, %p64
      %p66 = scmp.ne.s32.totalorder %s57, %s58
      %p67 = scmp.eq.s32.totalorder %s26, 0
      %p68 = por %p66, %p67
      %p69 = scmp.ne.s32.totalorder %s57, %s58
      %p70 = scmp.eq.s32.totalorder %s27, 1
      %p71 = por %p69, %p70
      %p73 = scmp.ne.s32.totalorder %s58, %s72
      %p74 = scmp.eq.s32.totalorder %s27, 0
      %p75 = por %p73, %p74
      %s77 = sadd.s32 %s76, 1
      %p80 = scmp.eq.s32.totalorder %s21, 1
      %p81 = scmp.ne.s32.totalorder %s76, %s78
      %p82 = scmp.eq.s32.totalorder %s21, 0
      %p83 = por %p81, %p82
      %p84 = scmp.ne.s32.totalorder %s76, %s78
      %p85 = scmp.eq.s32.totalorder %s26, 1
      %p86 = por %p84, %p85
      %p87 = scmp.ne.s32.totalorder %s78, %s79
      %p88 = scmp.eq.s32.totalorder %s26, 0
      %p89 = por %p87, %p88
      %p90 = scmp.ne.s32.totalorder %s78, %s79
      %p91 = scmp.eq.s32.totalorder %s27, 1
      %p92 = por %p90, %p91
      %p94 = scmp.ne.s32.totalorder %s79, %s93
      %p95 = scmp.eq.s32.totalorder %s27, 0
      %p96 = por %p94, %p95
      %s98 = sadd.s32 %s97, 1
      %p101 = scmp.eq.s32.totalorder %s21, 1
      %p102 = scmp.ne.s32.totalorder %s97, %s99
      %p103 = scmp.eq.s32.totalorder %s21, 0
      %p104 = por %p102, %p103
      %p105 = scmp.ne.s32.totalorder %s97, %s99
      %p106 = scmp.eq.s32.totalorder %s26, 1
      %p107 = por %p105, %p106
      %p108 = scmp.ne.s32.totalorder %s99, %s100
      %p109 = scmp.eq.s32.totalorder %s26, 0
      %p110 = por %p108, %p109
      %p111 = scmp.ne.s32.totalorder %s99, %s100
      %p112 = scmp.eq.s32.totalorder %s27, 1
      %p113 = por %p111, %p112
      %p115 = scmp.ne.s32.totalorder %s100, %s114
      %p116 = scmp.eq.s32.totalorder %s27, 0
      %p117 = por %p115, %p116
      %s119 = sadd.s32 %s118, 1
      %p122 = scmp.eq.s32.totalorder %s21, 1
      %p123 = scmp.ne.s32.totalorder %s118, %s120
      %p124 = scmp.eq.s32.totalorder %s21, 0
      %p125 = por %p123, %p124
      %p126 = scmp.ne.s32.totalorder %s118, %s120
      %p127 = scmp.eq.s32.totalorder %s26, 1
      %p128 = por %p126, %p127
      %p129 = scmp.ne.s32.totalorder %s120, %s121
      %p130 = scmp.eq.s32.totalorder %s26, 0
      %p131 = por %p129, %p130
      %p132 = scmp.ne.s32.totalorder %s120, %s121
      %p133 = scmp.eq.s32.totalorder %s27, 1
      %p134 = por %p132, %p133
      %p136 = scmp.ne.s32.totalorder %s121, %s135
      %p137 = scmp.eq.s32.totalorder %s27, 0
      %p138 = por %p136, %p137
      %s140 = sadd.s32 %s139, 1
      %p143 = scmp.eq.s32.totalorder %s21, 1
      %p144 = scmp.ne.s32.totalorder %s139, %s141
      %p145 = scmp.eq.s32.totalorder %s21, 0
      %p146 = por %p144, %p145
      %p147 = scmp.ne.s32.totalorder %s139, %s141
      %p148 = scmp.eq.s32.totalorder %s26, 1
      %p149 = por %p147, %p148
      %p150 = scmp.ne.s32.totalorder %s141, %s142
      %p151 = scmp.eq.s32.totalorder %s26, 0
      %p152 = por %p150, %p151
      %p153 = scmp.ne.s32.totalorder %s141, %s142
      %p154 = scmp.eq.s32.totalorder %s27, 1
      %p155 = por %p153, %p154
      %p157 = scmp.ne.s32.totalorder %s142, %s156
      %p158 = scmp.eq.s32.totalorder %s27, 0
      %p159 = por %p157, %p158
      %s161 = sadd.s32 %s160, 1
      %p164 = scmp.eq.s32.totalorder %s21, 1
      %p165 = scmp.ne.s32.totalorder %s160, %s162
      %p166 = scmp.eq.s32.totalorder %s21, 0
      %p167 = por %p165, %p166
      %p168 = scmp.ne.s32.totalorder %s160, %s162
      %p169 = scmp.eq.s32.totalorder %s26, 1
      %p170 = por %p168, %p169
      %p171 = scmp.ne.s32.totalorder %s162, %s163
      %p172 = scmp.eq.s32.totalorder %s26, 0
      %p173 = por %p171, %p172
      %p174 = scmp.ne.s32.totalorder %s162, %s163
      %p175 = scmp.eq.s32.totalorder %s27, 1
      %p176 = por %p174, %p175
      %p178 = scmp.ne.s32.totalorder %s163, %s177
      %p179 = scmp.eq.s32.totalorder %s27, 0
      %p180 = por %p178, %p179
      %s181 = ssub.s32 %s21, %s28
      %p182 = scmp.eq.s32.totalorder %s181, 0
      %s184 = sadd.s32 %s183, 1
      %s185 = scalar_select %p182, %s183, %s184
      %p188 = pneg %p182
      %p189 = scmp.eq.s32.totalorder %s21, 1
      %p190 = por %p188, %p189
      %p191 = scmp.ne.s32.totalorder %s183, %s186
      %p192 = scmp.eq.s32.totalorder %s21, 0
      %p193 = por %p191, %p192
      %p194 = scmp.ne.s32.totalorder %s183, %s186
      %p195 = scmp.eq.s32.totalorder %s26, 1
      %p196 = por %p194, %p195
      %p197 = scmp.ne.s32.totalorder %s186, %s187
      %p198 = scmp.eq.s32.totalorder %s26, 0
      %p199 = por %p197, %p198
      %p200 = scmp.ne.s32.totalorder %s186, %s187
      %p201 = scmp.eq.s32.totalorder %s27, 1
      %p202 = por %p200, %p201
      %p204 = scmp.ne.s32.totalorder %s187, %s203
      %p205 = scmp.eq.s32.totalorder %s27, 0
      %p206 = por %p204, %p205
      %p207 = scmp.le.s32.totalorder 1, %s21
      %p208 = scmp.lt.s32.totalorder %s21, 3
      %p209 = pnand %p207, %p208
      %p210 = pneg %p209
      // Predicated region
      $region9: #{tpu_custom_call.1} parent=5 // pred_check
        _
      $region10: #{tpu_custom_call.1} parent=5 // pred_check_branch
        %212 = sbr.rel (%p209) target = $region12
      $region11: #{tpu_custom_call.1} parent=5 // pred_region
        %s213 = ssub.s32 %s21, 1
        // Predicated region
        $region13: #{tpu_custom_call.1} parent=11 // pred_check
          %p214 = pneg %p68
        $region14: #{tpu_custom_call.1} parent=11 // pred_check_branch
          %216 = sbr.rel (%p214) target = $region16
        $region15: #{tpu_custom_call.1} parent=11 // pred_region
          %s218 = ssub.s32 3072, 3072
          %219 = vsyncadd [#allocation6], %s218
          %s220 = sshll.u32 [#allocation5], 4
          %s221 = int_to_ptr.vmem [resolvable:$true] %s220
          %226 = dma.hbm_to_vmem [thread:$0]  %s1, 3072, %s221, [#allocation6], 256, 256, 16
        $region16: #{tpu_custom_call.1} parent=11 // pred_fallthru
          _
        // Predicated region
        $region17: #{tpu_custom_call.1} parent=11 // pred_check
          %p227 = pneg %p89
        $region18: #{tpu_custom_call.1} parent=11 // pred_check_branch
          %229 = sbr.rel (%p227) target = $region20
        $region19: #{tpu_custom_call.1} parent=11 // pred_region
          _
        $region20: #{tpu_custom_call.1} parent=11 // pred_fallthru
          _
        // Predicated region
        $region21: #{tpu_custom_call.1} parent=11 // pred_check
          %p230 = pneg %p110
        $region22: #{tpu_custom_call.1} parent=11 // pred_check_branch
          %232 = sbr.rel (%p230) target = $region24
        $region23: #{tpu_custom_call.1} parent=11 // pred_region
          %s234 = ssub.s32 4096, 4096
          %235 = vsyncadd [#allocation6], %s234
          %s236 = sshll.u32 [#allocation7], 4
          %s237 = int_to_ptr.vmem [resolvable:$true] %s236
          %242 = dma.hbm_to_vmem [thread:$0]  %s3, 4096, %s237, [#allocation6], 128, 128, 8
        $region24: #{tpu_custom_call.1} parent=11 // pred_fallthru
          _
        // Predicated region
        $region25: #{tpu_custom_call.1} parent=11 // pred_check
          %p243 = pneg %p131
        $region26: #{tpu_custom_call.1} parent=11 // pred_check_branch
          %245 = sbr.rel (%p243) target = $region28
        $region27: #{tpu_custom_call.1} parent=11 // pred_region
          _
        $region28: #{tpu_custom_call.1} parent=11 // pred_fallthru
          _
        // Predicated region
        $region29: #{tpu_custom_call.1} parent=11 // pred_check
          %p246 = pneg %p152
        $region30: #{tpu_custom_call.1} parent=11 // pred_check_branch
          %248 = sbr.rel (%p246) target = $region32
        $region31: #{tpu_custom_call.1} parent=11 // pred_region
          %s250 = ssub.s32 2048, 2048
          %251 = vsyncadd [#allocation9], %s250
          %s252 = sshll.u32 [#allocation8], 4
          %s253 = int_to_ptr.vmem [resolvable:$true] %s252
          %258 = dma.hbm_to_vmem [thread:$0]  %s5, 2048, %s253, [#allocation9], 128, 128, 8
        $region32: #{tpu_custom_call.1} parent=11 // pred_fallthru
          _
        // Predicated region
        $region33: #{tpu_custom_call.1} parent=11 // pred_check
          %p259 = pneg %p173
        $region34: #{tpu_custom_call.1} parent=11 // pred_check_branch
          %261 = sbr.rel (%p259) target = $region36
        $region35: #{tpu_custom_call.1} parent=11 // pred_region
          _
        $region36: #{tpu_custom_call.1} parent=11 // pred_fallthru
          _
      $region12: #{tpu_custom_call.1} parent=5 // pred_fallthru
        _
      %p262 = scmp.lt.s32.totalorder %s21, 2
      // Predicated region
      $region37: #{tpu_custom_call.1} parent=5 // pred_check
        %p263 = pneg %p262
      $region38: #{tpu_custom_call.1} parent=5 // pred_check_branch
        %265 = sbr.rel (%p263) target = $region40
      $region39: #{tpu_custom_call.1} parent=5 // pred_region
        // Predicated region
        $region41: #{tpu_custom_call.1} parent=39 // pred_check
          %p266 = pneg %p41
        $region42: #{tpu_custom_call.1} parent=39 // pred_check_branch
          %268 = sbr.rel (%p266) target = $region44
        $region43: #{tpu_custom_call.1} parent=39 // pred_region
          %s269 = sand.u32 %s31, 1
          %s270 = scalar_lea.sflag [#allocation3], %s269
          %s271 = sand.u32 %s31, 1
          %s272 = smul.addr %s271, 16
          %s273 = scalar_lea.vmem [#allocation2], %s272
          %s274 = smul.u32 2, %s21
          %s276 = ssub.s32 256, 256
          %277 = vsyncadd %s270, %s276
          %s278 = smul.addr %s274, 128
          %s279 = scalar_lea.hbm %s0, %s278
          %s280 = sshll.u32 %s273, 4
          %s281 = int_to_ptr.vmem [resolvable:$true] %s280
          %286 = dma.hbm_to_vmem [thread:$0]  %s279, 256, %s281, %s270, 128, 128, 8
        $region44: #{tpu_custom_call.1} parent=39 // pred_fallthru
          _
      $region40: #{tpu_custom_call.1} parent=5 // pred_fallthru
        _
      %p287 = scmp.le.s32.totalorder 1, %s21
      %p288 = scmp.lt.s32.totalorder %s21, 3
      %p289 = pnand %p287, %p288
      %p290 = pneg %p289
      // Predicated region
      $region45: #{tpu_custom_call.1} parent=5 // pred_check
        _
      $region46: #{tpu_custom_call.1} parent=5 // pred_check_branch
        %292 = sbr.rel (%p289) target = $region48
      $region47: #{tpu_custom_call.1} parent=5 // pred_region
        %s293 = ssub.s32 %s21, 1
        %s294 = sand.u32 %s34, 1
        %s295 = scalar_lea.sflag [#allocation3], %s294
        %s296 = sand.u32 %s34, 1
        %s297 = smul.addr %s296, 16
        %s298 = scalar_lea.vmem [#allocation2], %s297
        // Predicated region
        $region49: #{tpu_custom_call.1} parent=47 // pred_check
          %p299 = pneg %p47
        $region50: #{tpu_custom_call.1} parent=47 // pred_check_branch
          %301 = sbr.rel (%p299) target = $region52
        $region51: #{tpu_custom_call.1} parent=47 // pred_region
          %302 = dma.done %s295, 256
        $region52: #{tpu_custom_call.1} parent=47 // pred_fallthru
          _
        // Predicated region
        $region53: #{tpu_custom_call.1} parent=47 // pred_check
          %p303 = pneg %p68
        $region54: #{tpu_custom_call.1} parent=47 // pred_check_branch
          %305 = sbr.rel (%p303) target = $region56
        $region55: #{tpu_custom_call.1} parent=47 // pred_region
          %306 = dma.done [#allocation6], 3072
        $region56: #{tpu_custom_call.1} parent=47 // pred_fallthru
          _
        // Predicated region
        $region57: #{tpu_custom_call.1} parent=47 // pred_check
          %p307 = pneg %p110
        $region58: #{tpu_custom_call.1} parent=47 // pred_check_branch
          %309 = sbr.rel (%p307) target = $region60
        $region59: #{tpu_custom_call.1} parent=47 // pred_region
          %310 = dma.done [#allocation6], 4096
        $region60: #{tpu_custom_call.1} parent=47 // pred_fallthru
          _
        // Predicated region
        $region61: #{tpu_custom_call.1} parent=47 // pred_check
          %p311 = pneg %p152
        $region62: #{tpu_custom_call.1} parent=47 // pred_check_branch
          %313 = sbr.rel (%p311) target = $region64
        $region63: #{tpu_custom_call.1} parent=47 // pred_region
          %314 = dma.done [#allocation9], 2048
        $region64: #{tpu_custom_call.1} parent=47 // pred_fallthru
          _
        %s315 = sand.u32 %s34, 1
        %s316 = scalar_lea.sflag [#allocation3], %s315
        %s317 = sand.u32 %s34, 1
        %s318 = smul.addr %s317, 16
        %s319 = scalar_lea.vmem [#allocation2], %s318
        %p320 = pneg %p47
        %p321 = pneg %p44
        %p322 = pneg %p68
        %p323 = pneg %p65
        %p324 = pneg %p89
        %p325 = pneg %p86
        %p326 = pneg %p110
        %p327 = pneg %p107
        %p328 = pneg %p131
        %p329 = pneg %p128
        %p330 = pneg %p152
        %p331 = pneg %p149
        %p332 = pneg %p173
        %p333 = pneg %p170
        %p334 = pneg %p199
        %p335 = pneg %p196
        %s336 = sand.u32 %s186, 1
        %s337 = scalar_lea.sflag [#allocation4], %s336
        %s338 = sand.u32 %s186, 1
        %s339 = smul.addr %s338, 16
        %s340 = scalar_lea.vmem [#allocation10], %s339
        %s341 = smul.u32 2, %s26
        %s342 = smul.u32 2, %s26
        %v343 = vld [vmem:[%s298] sm:$0xff]
        %v344 = vld [vmem:[%s298 + $0x8] sm:$0xff]
        %v345 = vld [vmem:[#allocation5] sm:$0xff]
        %v346 = vld [vmem:[#allocation5 + $0x8] sm:$0xff]
        %v347 = vld [vmem:[#allocation5 + $0x10] sm:$0xff]
        %v348 = vld [vmem:[#allocation5 + $0x18] sm:$0xff]
        %v349 = vld [vmem:[#allocation5 + $0x20] sm:$0xff]
        %v350 = vld [vmem:[#allocation5 + $0x28] sm:$0xff]
        %v351 = vld [vmem:[#allocation5 + $0x30] sm:$0xff]
        %v352 = vld [vmem:[#allocation5 + $0x38] sm:$0xff]
        %v353 = vld [vmem:[#allocation5 + $0x40] sm:$0xff]
        %v354 = vld [vmem:[#allocation5 + $0x48] sm:$0xff]
        %v355 = vld [vmem:[#allocation5 + $0x50] sm:$0xff]
        %v356 = vld [vmem:[#allocation5 + $0x58] sm:$0xff]
        %v357 = vld [vmem:[#allocation5 + $0x60] sm:$0xff]
        %v358 = vld [vmem:[#allocation5 + $0x68] sm:$0xff]
        %v359 = vld [vmem:[#allocation5 + $0x70] sm:$0xff]
        %v360 = vld [vmem:[#allocation5 + $0x78] sm:$0xff]
        %v361 = vld [vmem:[#allocation5 + $0x80] sm:$0xff]
        %v362 = vld [vmem:[#allocation5 + $0x88] sm:$0xff]
        %v363 = vld [vmem:[#allocation5 + $0x90] sm:$0xff]
        %v364 = vld [vmem:[#allocation5 + $0x98] sm:$0xff]
        %v365 = vld [vmem:[#allocation5 + $0xa0] sm:$0xff]
        %v366 = vld [vmem:[#allocation5 + $0xa8] sm:$0xff]
        %v367 = vld [vmem:[#allocation5 + $0xb0] sm:$0xff]
        %v368 = vld [vmem:[#allocation5 + $0xb8] sm:$0xff]
        %v369 = vld [vmem:[%s2] sm:$0x3]
        %v371 = vlaneseq
        %v372 = vshrl.u32 %v371, 7
        %v373 = vsub.s32 0, %v372
        %v374 = vrot.slane %v369, %v373
        %v375 = vlaneseq
        %v376 = vshrl.u32 %v375, 7
        %v377 = vsub.s32 1, %v376
        %v378 = vrot.slane %v369, %v377
        %vm381 = vcmask 785408
        %v383 = vsel %vm381, %v343, 0
        %v386 = vsel %vm381, %v344, 0
        %388 = vmatprep.subr.mxu0 %v346
        %389 = vmatpush1.msra.mxu0 %v345
        %390 = vmatprep.subr.mxu0 %v348
        %391 = vmatpush1.msra.mxu0 %v347
        %392 = vmatprep.subr.mxu0 %v350
        %393 = vmatpush1.msra.mxu0 %v349
        %394 = vmatprep.subr.mxu0 %v352
        %395 = vmatpush1.msra.mxu0 %v351
        %396 = vmatprep.subr.mxu0 %v354
        %397 = vmatpush1.msra.mxu0 %v353
        %398 = vmatprep.subr.mxu0 %v356
        %399 = vmatpush1.msra.mxu0 %v355
        %400 = vmatprep.subr.mxu0 %v358
        %401 = vmatpush1.msra.mxu0 %v357
        %402 = vmatprep.subr.mxu0 %v360
        %403 = vmatpush1.msra.mxu0 %v359
        %404 = vmatprep.subr.mxu0 %v362
        %405 = vmatpush1.msra.mxu0 %v361
        %406 = vmatprep.subr.mxu0 %v364
        %407 = vmatpush1.msra.mxu0 %v363
        %408 = vmatprep.subr.mxu0 %v366
        %409 = vmatpush1.msra.mxu0 %v365
        %410 = vmatprep.subr.mxu0 %v368
        %411 = vmatpush1.msra.mxu0 %v367
        %412 = vmatprep.subr.mxu0 0.0
        %413 = vmatpush1.msra.mxu0 0.0
        %414 = vmatprep.subr.mxu0 0.0
        %415 = vmatpush1.msra.mxu0 0.0
        %416 = vmatprep.subr.mxu0 0.0
        %417 = vmatpush1.msra.mxu0 0.0
        %418 = vmatprep.subr.mxu0 0.0
        %419 = vmatpush1.msra.mxu0 0.0
        %420 = vmatprep.subr.mxu0 0.0
        %421 = vmatpush1.msra.mxu0 0.0
        %422 = vmatprep.subr.mxu0 0.0
        %423 = vmatpush1.msra.mxu0 0.0
        %424 = vmatprep.subr.mxu0 0.0
        %425 = vmatpush1.msra.mxu0 0.0
        %426 = vmatprep.subr.mxu0 0.0
        %427 = vmatpush1.msra.mxu0 0.0
        %428 = vmatprep.subr.mxu0 0.0
        %429 = vmatpush1.msra.mxu0 0.0
        %430 = vmatprep.subr.mxu0 0.0
        %431 = vmatpush1.msra.mxu0 0.0
        %432 = vmatprep.subr.mxu0 0.0
        %433 = vmatpush1.msra.mxu0 0.0
        %434 = vmatprep.subr.mxu0 0.0
        %435 = vmatpush1.msra.mxu0 0.0
        %436 = vmatprep.subr.mxu0 0.0
        %437 = vmatpush1.msra.mxu0 0.0
        %438 = vmatprep.subr.mxu0 0.0
        %439 = vmatpush1.msra.mxu0 0.0
        %440 = vmatprep.subr.mxu0 0.0
        %441 = vmatpush1.msra.mxu0 0.0
        %442 = vmatprep.subr.mxu0 0.0
        %443 = vmatpush1.msra.mxu0 0.0
        %444 = vmatprep.subr.mxu0 0.0
        %445 = vmatpush1.msra.mxu0 0.0
        %446 = vmatprep.subr.mxu0 0.0
        %447 = vmatpush1.msra.mxu0 0.0
        %448 = vmatprep.subr.mxu0 0.0
        %449 = vmatpush1.msra.mxu0 0.0
        %450 = vmatprep.subr.mxu0 0.0
        %451 = vmatpush1.msra.mxu0 0.0
        %452 = vmatprep.mubr.f32.mxu0 0.0
        %453 = vmatmul.mubr.f32.gmra.mrb[0].mxu0 %v383
        %v454 = vpop.f32.mrb[0].mxu0
        %v455 = vadd.f32 %v374, %v454
        %v456 = vpop.f32.mrb[0].mxu0
        %v457 = vadd.f32 %v378, %v456
        %458 = vmatprep.mubr.f32.mxu0 0.0
        %459 = vmatmul.mubr.f32.gmra.mrb[0].mxu0 %v386
        %v460 = vpop.f32.mrb[0].mxu0
        %v461 = vadd.f32 %v374, %v460
        %v462 = vpop.f32.mrb[0].mxu0
        %v463 = vadd.f32 %v378, %v462
        %464 = vdwg.mxu0
        %v465 = vmax.f32 %v455, 0.0
        %v466 = vmax.f32 %v457, 0.0
        %v467 = vmax.f32 %v461, 0.0
        %v468 = vmax.f32 %v463, 0.0
        %v469 = vld [vmem:[#allocation7] sm:$0xff]
        %v470 = vld [vmem:[#allocation7 + $0x8] sm:$0xff]
        %v471 = vld [vmem:[#allocation7 + $0x10] sm:$0xff]
        %v472 = vld [vmem:[#allocation7 + $0x18] sm:$0xff]
        %v473 = vld [vmem:[#allocation7 + $0x20] sm:$0xff]
        %v474 = vld [vmem:[#allocation7 + $0x28] sm:$0xff]
        %v475 = vld [vmem:[#allocation7 + $0x30] sm:$0xff]
        %v476 = vld [vmem:[#allocation7 + $0x38] sm:$0xff]
        %v477 = vld [vmem:[#allocation7 + $0x40] sm:$0xff]
        %v478 = vld [vmem:[#allocation7 + $0x48] sm:$0xff]
        %v479 = vld [vmem:[#allocation7 + $0x50] sm:$0xff]
        %v480 = vld [vmem:[#allocation7 + $0x58] sm:$0xff]
        %v481 = vld [vmem:[#allocation7 + $0x60] sm:$0xff]
        %v482 = vld [vmem:[#allocation7 + $0x68] sm:$0xff]
        %v483 = vld [vmem:[#allocation7 + $0x70] sm:$0xff]
        %v484 = vld [vmem:[#allocation7 + $0x78] sm:$0xff]
        %v485 = vld [vmem:[#allocation7 + $0x80] sm:$0xff]
        %v486 = vld [vmem:[#allocation7 + $0x88] sm:$0xff]
        %v487 = vld [vmem:[#allocation7 + $0x90] sm:$0xff]
        %v488 = vld [vmem:[#allocation7 + $0x98] sm:$0xff]
        %v489 = vld [vmem:[#allocation7 + $0xa0] sm:$0xff]
        %v490 = vld [vmem:[#allocation7 + $0xa8] sm:$0xff]
        %v491 = vld [vmem:[#allocation7 + $0xb0] sm:$0xff]
        %v492 = vld [vmem:[#allocation7 + $0xb8] sm:$0xff]
        %v493 = vld [vmem:[#allocation7 + $0xc0] sm:$0xff]
        %v494 = vld [vmem:[#allocation7 + $0xc8] sm:$0xff]
        %v495 = vld [vmem:[#allocation7 + $0xd0] sm:$0xff]
        %v496 = vld [vmem:[#allocation7 + $0xd8] sm:$0xff]
        %v497 = vld [vmem:[#allocation7 + $0xe0] sm:$0xff]
        %v498 = vld [vmem:[#allocation7 + $0xe8] sm:$0xff]
        %v499 = vld [vmem:[#allocation7 + $0xf0] sm:$0xff]
        %v500 = vld [vmem:[#allocation7 + $0xf8] sm:$0xff]
        %v501 = vld [vmem:[%s4] sm:$0x1]
        %v503 = vlaneseq
        %v504 = vshrl.u32 %v503, 7
        %v505 = vsub.s32 0, %v504
        %v506 = vrot.slane %v501, %v505
        %508 = vmatprep.subr.mxu0 0.0
        %509 = vmatpush1.msra.mxu0 %v469
        %510 = vmatprep.subr.mxu0 0.0
        %511 = vmatpush1.msra.mxu0 %v470
        %512 = vmatprep.subr.mxu0 0.0
        %513 = vmatpush1.msra.mxu0 %v471
        %514 = vmatprep.subr.mxu0 0.0
        %515 = vmatpush1.msra.mxu0 %v472
        %516 = vmatprep.subr.mxu0 0.0
        %517 = vmatpush1.msra.mxu0 %v473
        %518 = vmatprep.subr.mxu0 0.0
        %519 = vmatpush1.msra.mxu0 %v474
        %520 = vmatprep.subr.mxu0 0.0
        %521 = vmatpush1.msra.mxu0 %v475
        %522 = vmatprep.subr.mxu0 0.0
        %523 = vmatpush1.msra.mxu0 %v476
        %524 = vmatprep.subr.mxu0 0.0
        %525 = vmatpush1.msra.mxu0 %v477
        %526 = vmatprep.subr.mxu0 0.0
        %527 = vmatpush1.msra.mxu0 %v478
        %528 = vmatprep.subr.mxu0 0.0
        %529 = vmatpush1.msra.mxu0 %v479
        %530 = vmatprep.subr.mxu0 0.0
        %531 = vmatpush1.msra.mxu0 %v480
        %532 = vmatprep.subr.mxu0 0.0
        %533 = vmatpush1.msra.mxu0 %v481
        %534 = vmatprep.subr.mxu0 0.0
        %535 = vmatpush1.msra.mxu0 %v482
        %536 = vmatprep.subr.mxu0 0.0
        %537 = vmatpush1.msra.mxu0 %v483
        %538 = vmatprep.subr.mxu0 0.0
        %539 = vmatpush1.msra.mxu0 %v484
        %540 = vmatprep.subr.mxu0 0.0
        %541 = vmatpush1.msra.mxu0 %v485
        %542 = vmatprep.subr.mxu0 0.0
        %543 = vmatpush1.msra.mxu0 %v486
        %544 = vmatprep.subr.mxu0 0.0
        %545 = vmatpush1.msra.mxu0 %v487
        %546 = vmatprep.subr.mxu0 0.0
        %547 = vmatpush1.msra.mxu0 %v488
        %548 = vmatprep.subr.mxu0 0.0
        %549 = vmatpush1.msra.mxu0 %v489
        %550 = vmatprep.subr.mxu0 0.0
        %551 = vmatpush1.msra.mxu0 %v490
        %552 = vmatprep.subr.mxu0 0.0
        %553 = vmatpush1.msra.mxu0 %v491
        %554 = vmatprep.subr.mxu0 0.0
        %555 = vmatpush1.msra.mxu0 %v492
        %556 = vmatprep.subr.mxu0 0.0
        %557 = vmatpush1.msra.mxu0 %v493
        %558 = vmatprep.subr.mxu0 0.0
        %559 = vmatpush1.msra.mxu0 %v494
        %560 = vmatprep.subr.mxu0 0.0
        %561 = vmatpush1.msra.mxu0 %v495
        %562 = vmatprep.subr.mxu0 0.0
        %563 = vmatpush1.msra.mxu0 %v496
        %564 = vmatprep.subr.mxu0 0.0
        %565 = vmatpush1.msra.mxu0 %v497
        %566 = vmatprep.subr.mxu0 0.0
        %567 = vmatpush1.msra.mxu0 %v498
        %568 = vmatprep.subr.mxu0 0.0
        %569 = vmatpush1.msra.mxu0 %v499
        %570 = vmatprep.subr.mxu0 0.0
        %571 = vmatpush1.msra.mxu0 %v500
        %572 = vmatprep.mubr.f32.mxu0 %v466
        %573 = vmatmul.mubr.f32.gmra.mrb[0].mxu0 %v465
        %v574 = vpop.f32.mrb[0].mxu0
        %v575 = vadd.f32 %v506, %v574
        %v576 = vpop.f32.mrb[0].mxu0
        %577 = vmatprep.mubr.f32.mxu0 %v468
        %578 = vmatmul.mubr.f32.gmra.mrb[0].mxu0 %v467
        %v579 = vpop.f32.mrb[0].mxu0
        %v580 = vadd.f32 %v506, %v579
        %v581 = vpop.f32.mrb[0].mxu0
        %582 = vdwg.mxu0
        %v583 = vmax.f32 %v575, 0.0
        %v584 = vmax.f32 %v580, 0.0
        %v585 = vld [vmem:[#allocation8] sm:$0xff]
        %v586 = vld [vmem:[#allocation8 + $0x8] sm:$0xff]
        %v587 = vld [vmem:[#allocation8 + $0x10] sm:$0xff]
        %v588 = vld [vmem:[#allocation8 + $0x18] sm:$0xff]
        %v589 = vld [vmem:[#allocation8 + $0x20] sm:$0xff]
        %v590 = vld [vmem:[#allocation8 + $0x28] sm:$0xff]
        %v591 = vld [vmem:[#allocation8 + $0x30] sm:$0xff]
        %v592 = vld [vmem:[#allocation8 + $0x38] sm:$0xff]
        %v593 = vld [vmem:[#allocation8 + $0x40] sm:$0xff]
        %v594 = vld [vmem:[#allocation8 + $0x48] sm:$0xff]
        %v595 = vld [vmem:[#allocation8 + $0x50] sm:$0xff]
        %v596 = vld [vmem:[#allocation8 + $0x58] sm:$0xff]
        %v597 = vld [vmem:[#allocation8 + $0x60] sm:$0xff]
        %v598 = vld [vmem:[#allocation8 + $0x68] sm:$0xff]
        %v599 = vld [vmem:[#allocation8 + $0x70] sm:$0xff]
        %v600 = vld [vmem:[#allocation8 + $0x78] sm:$0xff]
        %v601 = vld [vmem:[%s6] sm:$0x1]
        %v603 = vlaneseq
        %v604 = vshrl.u32 %v603, 7
        %v605 = vsub.s32 0, %v604
        %v606 = vrot.slane %v601, %v605
        %608 = vmatprep.subr.mxu0 0.0
        %609 = vmatpush1.msra.mxu0 %v585
        %610 = vmatprep.subr.mxu0 0.0
        %611 = vmatpush1.msra.mxu0 %v586
        %612 = vmatprep.subr.mxu0 0.0
        %613 = vmatpush1.msra.mxu0 %v587
        %614 = vmatprep.subr.mxu0 0.0
        %615 = vmatpush1.msra.mxu0 %v588
        %616 = vmatprep.subr.mxu0 0.0
        %617 = vmatpush1.msra.mxu0 %v589
        %618 = vmatprep.subr.mxu0 0.0
        %619 = vmatpush1.msra.mxu0 %v590
        %620 = vmatprep.subr.mxu0 0.0
        %621 = vmatpush1.msra.mxu0 %v591
        %622 = vmatprep.subr.mxu0 0.0
        %623 = vmatpush1.msra.mxu0 %v592
        %624 = vmatprep.subr.mxu0 0.0
        %625 = vmatpush1.msra.mxu0 %v593
        %626 = vmatprep.subr.mxu0 0.0
        %627 = vmatpush1.msra.mxu0 %v594
        %628 = vmatprep.subr.mxu0 0.0
        %629 = vmatpush1.msra.mxu0 %v595
        %630 = vmatprep.subr.mxu0 0.0
        %631 = vmatpush1.msra.mxu0 %v596
        %632 = vmatprep.subr.mxu0 0.0
        %633 = vmatpush1.msra.mxu0 %v597
        %634 = vmatprep.subr.mxu0 0.0
        %635 = vmatpush1.msra.mxu0 %v598
        %636 = vmatprep.subr.mxu0 0.0
        %637 = vmatpush1.msra.mxu0 %v599
        %638 = vmatprep.subr.mxu0 0.0
        %639 = vmatpush1.msra.mxu0 %v600
        %640 = vmatprep.subr.mxu0 0.0
        %641 = vmatpush1.msra.mxu0 0.0
        %642 = vmatprep.subr.mxu0 0.0
        %643 = vmatpush1.msra.mxu0 0.0
        %644 = vmatprep.subr.mxu0 0.0
        %645 = vmatpush1.msra.mxu0 0.0
        %646 = vmatprep.subr.mxu0 0.0
        %647 = vmatpush1.msra.mxu0 0.0
        %648 = vmatprep.subr.mxu0 0.0
        %649 = vmatpush1.msra.mxu0 0.0
        %650 = vmatprep.subr.mxu0 0.0
        %651 = vmatpush1.msra.mxu0 0.0
        %652 = vmatprep.subr.mxu0 0.0
        %653 = vmatpush1.msra.mxu0 0.0
        %654 = vmatprep.subr.mxu0 0.0
        %655 = vmatpush1.msra.mxu0 0.0
        %656 = vmatprep.subr.mxu0 0.0
        %657 = vmatpush1.msra.mxu0 0.0
        %658 = vmatprep.subr.mxu0 0.0
        %659 = vmatpush1.msra.mxu0 0.0
        %660 = vmatprep.subr.mxu0 0.0
        %661 = vmatpush1.msra.mxu0 0.0
        %662 = vmatprep.subr.mxu0 0.0
        %663 = vmatpush1.msra.mxu0 0.0
        %664 = vmatprep.subr.mxu0 0.0
        %665 = vmatpush1.msra.mxu0 0.0
        %666 = vmatprep.subr.mxu0 0.0
        %667 = vmatpush1.msra.mxu0 0.0
        %668 = vmatprep.subr.mxu0 0.0
        %669 = vmatpush1.msra.mxu0 0.0
        %670 = vmatprep.subr.mxu0 0.0
        %671 = vmatpush1.msra.mxu0 0.0
        %672 = vmatprep.mubr.f32.mxu0 0.0
        %673 = vmatmul.mubr.f32.gmra.mrb[0].mxu0 %v583
        %v674 = vpop.f32.mrb[0].mxu0
        %v675 = vadd.f32 %v606, %v674
        %v676 = vpop.f32.mrb[0].mxu0
        %677 = vmatprep.mubr.f32.mxu0 0.0
        %678 = vmatmul.mubr.f32.gmra.mrb[0].mxu0 %v584
        %v679 = vpop.f32.mrb[0].mxu0
        %v680 = vadd.f32 %v606, %v679
        %v681 = vpop.f32.mrb[0].mxu0
        %682 = vdwg.mxu0
        %683 = vst [vmem:[%s340] sm:$0xff] %v675
        %684 = vst [vmem:[%s340 + $0x8] sm:$0xff] %v680
        %s685 = sand.u32 %s186, 1
        %s686 = scalar_lea.sflag [#allocation4], %s685
        %s687 = sand.u32 %s186, 1
        %s688 = smul.addr %s687, 16
        %s689 = scalar_lea.vmem [#allocation10], %s688
        // Predicated region
        $region65: #{tpu_custom_call.1} parent=47 // pred_check
          %p690 = pneg %p196
        $region66: #{tpu_custom_call.1} parent=47 // pred_check_branch
          %692 = sbr.rel (%p690) target = $region68
        $region67: #{tpu_custom_call.1} parent=47 // pred_region
          %s693 = smul.u32 2, %s26
          %s695 = ssub.s32 256, 256
          %696 = vsyncadd %s686, %s695
          %s697 = smul.addr %s693, 128
          %s698 = scalar_lea.hbm %s7, %s697
          %s699 = sshll.u32 %s689, 4
          %s700 = int_to_ptr.vmem [resolvable:$true] %s699
          %705 = dma.vmem_to_hbm [thread:$0]  %s700, 256, %s698, %s686, 128, 128, 8
        $region68: #{tpu_custom_call.1} parent=47 // pred_fallthru
          _
      $region48: #{tpu_custom_call.1} parent=5 // pred_fallthru
        _
      %p706 = scmp.le.s32.totalorder 2, %s21
      // Predicated region
      $region69: #{tpu_custom_call.1} parent=5 // pred_check
        %p707 = pneg %p706
      $region70: #{tpu_custom_call.1} parent=5 // pred_check_branch
        %709 = sbr.rel (%p707) target = $region72
      $region71: #{tpu_custom_call.1} parent=5 // pred_region
        %s710 = ssub.s32 %s21, 2
        // Predicated region
        $region73: #{tpu_custom_call.1} parent=71 // pred_check
          %p711 = pneg %p202
        $region74: #{tpu_custom_call.1} parent=71 // pred_check_branch
          %713 = sbr.rel (%p711) target = $region76
        $region75: #{tpu_custom_call.1} parent=71 // pred_region
          %s714 = sand.u32 %s187, 1
          %s715 = scalar_lea.sflag [#allocation4], %s714
          %s716 = sand.u32 %s187, 1
          %s717 = smul.addr %s716, 16
          %s718 = scalar_lea.vmem [#allocation10], %s717
          %719 = dma.done %s715, 256
        $region76: #{tpu_custom_call.1} parent=71 // pred_fallthru
          _
      $region72: #{tpu_custom_call.1} parent=5 // pred_fallthru
        _
    $region6: #{tpu_custom_call.1} parent=1 // loop_footer
      %s25 = sadd.s32 1, %s21
    $region7: #{tpu_custom_call.1} parent=1 // loop_footer_branch
      %20 = sbr.rel target = $region3
    $region8: #{tpu_custom_call.1} parent=1 // loop_exit
      _
    %720 = vsyncpa [#allocation3], 1
    %s721 = scalar_lea.sflag [#allocation3], 1
    %722 = vsyncpa %s721, 1
    %723 = vsyncpa [#allocation6], 1
    %724 = vsyncpa [#allocation9], 1
    %725 = vsyncpa [#allocation4], 1
    %s726 = scalar_lea.sflag [#allocation4], 1
    %727 = vsyncpa %s726, 1

</llo_original>
